<compile_context>
chip_gen: v5e
topology: v5e:2x2
jax: 0.10.0
libtpu: 0.0.40
codegen_flags: <defaults>
</compile_context>

<pallas_src>
import functools

import jax
import jax.numpy as jnp
from jax import lax
from jax.experimental import pallas as pl
from jax.experimental.pallas import tpu as pltpu


def _matmul_bias_lrelu_kernel(w_ref, col_ref, o_ref, *, neg_slope):
    # w_ref   : (Co, K*K*Ci + 1)      conv weight, bias folded as last column
    # col_ref : (K*K*Ci + 1, N*Ho*Wo) im2col patches, trailing ones row for bias
    # o_ref   : (Co, N*Ho*Wo)         lane-dense output
    acc = jnp.dot(w_ref[...], col_ref[...], preferred_element_type=jnp.float32)
    o_ref[...] = jnp.where(acc >= 0, acc, neg_slope * acc).astype(o_ref.dtype)


def cnn_one_to_one(image_nchw, weight_oihw, bias, *, stride, dilation,
                   neg_slope=0.01):
    """Forward pass of CNNOneToOne. image_nchw: (N, Ci, H, W) like PyTorch."""
    N, Ci, H, W = image_nchw.shape
    Co, Ci_w, K, K2 = weight_oihw.shape
    assert Ci == Ci_w and K == K2

    effective_width = K + (K - 1) * (dilation - 1)
    pad = (effective_width - 1) // 2   # matches the PyTorch module's padding choice

    Ho = (H + 2 * pad - dilation * (K - 1) - 1) // stride + 1
    Wo = (W + 2 * pad - dilation * (K - 1) - 1) // stride + 1

    # --- wrapper-side im2col (plain XLA slicing; kernel only does the matmul) ---
    x = jnp.pad(image_nchw, ((0, 0), (0, 0), (pad, pad), (pad, pad)))
    taps = []
    for kh in range(K):
        for kw in range(K):
            h0, w0 = kh * dilation, kw * dilation
            win = lax.slice(
                x,
                (0, 0, h0, w0),
                (N, Ci, h0 + (Ho - 1) * stride + 1, w0 + (Wo - 1) * stride + 1),
                (1, 1, stride, stride))                        # (N, Ci, Ho, Wo)
            taps.append(win)
    col = jnp.stack(taps, axis=0)                              # (K*K, N, Ci, Ho, Wo)
    # Contraction index = (kh, kw, ci); lane index = (n, ho, wo).
    col = col.transpose(0, 2, 1, 3, 4).reshape(K * K * Ci, N * Ho * Wo)
    ones = jnp.ones((1, N * Ho * Wo), dtype=col.dtype)
    col_aug = jnp.concatenate([col, ones], axis=0)             # (K*K*Ci+1, N*Ho*Wo)

    # (Co, Ci, Kh, Kw) -> (Co, Kh*Kw*Ci) to match col ordering; fold bias column.
    w2 = jnp.transpose(weight_oihw, (0, 2, 3, 1)).reshape(Co, K * K * Ci)
    w_aug = jnp.concatenate([w2, bias.reshape(Co, 1).astype(w2.dtype)], axis=1)

    Kdim = K * K * Ci + 1
    Ldim = N * Ho * Wo

    kernel = functools.partial(_matmul_bias_lrelu_kernel, neg_slope=neg_slope)

    out_flat = pl.pallas_call(
        kernel,
        out_shape=jax.ShapeDtypeStruct((Co, Ldim), image_nchw.dtype),
        grid_spec=pltpu.PrefetchScalarGridSpec(
            num_scalar_prefetch=0,
            grid=(1,),   # single step: whole (batch-fused) problem in one matmul
            in_specs=[
                pl.BlockSpec((Co, Kdim), lambda i: (0, 0)),
                pl.BlockSpec((Kdim, Ldim), lambda i: (0, 0)),
            ],
            out_specs=pl.BlockSpec((Co, Ldim), lambda i: (0, 0)),
        ),
        compiler_params=pltpu.CompilerParams(
            dimension_semantics=("arbitrary",)),
    )(w_aug, col_aug)

    # (Co, N*Ho*Wo) -> (N, Co, Ho, Wo)
    return out_flat.reshape(Co, N, Ho, Wo).transpose(1, 0, 2, 3)


def _reference(image_nchw, weight_oihw, bias, *, stride, dilation,
               neg_slope=0.01):
    K = weight_oihw.shape[2]
    effective_width = K + (K - 1) * (dilation - 1)
    pad = (effective_width - 1) // 2
    y = lax.conv_general_dilated(
        image_nchw, weight_oihw, window_strides=(stride, stride),
        padding=[(pad, pad), (pad, pad)],
        rhs_dilation=(dilation, dilation),
        dimension_numbers=("NCHW", "OIHW", "NCHW"))
    y = y + bias.reshape(1, -1, 1, 1)
    y = jnp.where(y >= 0, y, neg_slope * y)
    return y


if __name__ == "__main__":
    # Module hyperparameters (chosen so that output spatial size == input).
    in_channels, out_channels = 4, 8
    kernel_size, stride, dilation = 3, 1, 2
    N, H, W = 2, 16, 16

    key = jax.random.PRNGKey(0)
    kx, kw, kb = jax.random.split(key, 3)
    # Deterministic synthetic parameter init (not loading a checkpoint).
    fan_in = in_channels * kernel_size * kernel_size
    bound = 1.0 / jnp.sqrt(fan_in)
    image = jax.random.normal(kx, (N, in_channels, H, W), dtype=jnp.float32)
    weight = jax.random.uniform(
        kw, (out_channels, in_channels, kernel_size, kernel_size),
        minval=-bound, maxval=bound, dtype=jnp.float32)
    bias = jax.random.uniform(
        kb, (out_channels,), minval=-bound, maxval=bound, dtype=jnp.float32)

    out = cnn_one_to_one(image, weight, bias, stride=stride, dilation=dilation)
    out = jax.block_until_ready(out)

    ref = _reference(image, weight, bias, stride=stride, dilation=dilation)
    assert out.shape == ref.shape, (out.shape, ref.shape)
    assert jnp.allclose(out, ref, atol=1e-4, rtol=1e-4), "mismatch vs reference"

    print("KERNEL_OK")
</pallas_src>

<mosaic_0001>
module attributes {stable_mosaic.version = 11 : i64} {
  func.func @_matmul_bias_lrelu_kernel(%arg0: i32, %arg1: memref<8x37xf32, #tpu.memory_space<vmem>>, %arg2: memref<37x512xf32, #tpu.memory_space<vmem>>, %arg3: memref<8x512xf32, #tpu.memory_space<vmem>>) attributes {dimension_semantics = [#tpu.dimension_semantics<arbitrary>], iteration_bounds = array<i64: 1>, scalar_prefetch = 0 : i64, scratch_operands = 0 : i64, tpu.core_type = #tpu.core_type<tc>, window_params = [{pipeline_mode = #tpu.pipeline_mode<synchronous>, transform_indices = @transform_0, window_bounds = array<i64: 8, 37>}, {pipeline_mode = #tpu.pipeline_mode<synchronous>, transform_indices = @transform_1, window_bounds = array<i64: 37, 512>}, {pipeline_mode = #tpu.pipeline_mode<synchronous>, transform_indices = @transform_2, window_bounds = array<i64: 8, 512>}]} {
    %c0 = arith.constant 0 : index
    %c0_0 = arith.constant 0 : index
    %0 = vector.load %arg1[%c0, %c0_0] : memref<8x37xf32, #tpu.memory_space<vmem>>, vector<8x37xf32>
    %c0_1 = arith.constant 0 : index
    %c0_2 = arith.constant 0 : index
    %1 = vector.load %arg2[%c0_1, %c0_2] : memref<37x512xf32, #tpu.memory_space<vmem>>, vector<37x512xf32>
    %cst = arith.constant dense<0.000000e+00> : vector<8x512xf32>
    %2 = tpu.matmul %0, %1, %cst {dimension_numbers = #tpu.dot_dimension_numbers<[1], [0], [0], [1], [0, 0, 1, 1], [], []>} : vector<8x37xf32>, vector<37x512xf32>, vector<8x512xf32> -> vector<8x512xf32>
    %cst_3 = arith.constant 0.000000e+00 : f32
    %3 = vector.broadcast %cst_3 : f32 to vector<8x512xf32>
    %4 = arith.cmpf oge, %2, %3 : vector<8x512xf32>
    %cst_4 = arith.constant 0.00999999977 : f32
    %5 = vector.broadcast %cst_4 : f32 to vector<8x512xf32>
    %6 = arith.mulf %5, %2 : vector<8x512xf32>
    %7 = arith.select %4, %2, %6 : vector<8x512xi1>, vector<8x512xf32>
    %c0_5 = arith.constant 0 : index
    %c0_6 = arith.constant 0 : index
    %8 = vector.load %arg3[%c0_5, %c0_6] : memref<8x512xf32, #tpu.memory_space<vmem>>, vector<8x512xf32>
    tpu.vector_store %arg3[%c0_5, %c0_6], %7 {strides = array<i32>} : memref<8x512xf32, #tpu.memory_space<vmem>>, vector<8x512xf32>,
    return
  }
  func.func @transform_0(%arg0: i32) -> (i32, i32) {
    %c0_i32 = arith.constant 0 : i32
    %c0_i32_0 = arith.constant 0 : i32
    %c0_i32_1 = arith.constant 0 : i32
    return %c0_i32, %c0_i32_0 : i32, i32
  }
  func.func @transform_1(%arg0: i32) -> (i32, i32) {
    %c0_i32 = arith.constant 0 : i32
    %c0_i32_0 = arith.constant 0 : i32
    %c0_i32_1 = arith.constant 0 : i32
    return %c0_i32, %c0_i32_0 : i32, i32
  }
  func.func @transform_2(%arg0: i32) -> (i32, i32) {
    %c0_i32 = arith.constant 0 : i32
    %c0_i32_0 = arith.constant 0 : i32
    %c0_i32_1 = arith.constant 0 : i32
    return %c0_i32, %c0_i32_0 : i32, i32
  }
}

</mosaic_0001>

<llo_original>
// kernel: tpu_custom_call.1
$region0: #{tpu_custom_call.1}
  #allocation0 [shape = 'u32[]', space=smem, size = 0x4, offset = 0x4, fixed_abs, tag = 'smem constant byte address 0x4 - core index']
  #allocation1 [shape = 'u32[72,128]{1,0:T(1,128)}', space=vmem, size = 0x9000, scoped, tag = 'internal scratch']
  %s0 = inlined_call_operand.hbm [shape: f32[8,37], index: 0, kind: input, shape index: {}]
  %s1 = inlined_call_operand.hbm [shape: f32[37,512], index: 1, kind: input, shape index: {}]
  %s2 = inlined_call_operand.hbm [shape: f32[8,512], index: 2, kind: output, shape index: {}]
  %s3 = sld [smem:[#allocation0]]
  $region26: #{tpu_custom_call.1} parent=0
    _
  %s5 = ssub.s32 1, %s3
  %s6 = scalar_select 0, %s5, %s3
  $region1: #{tpu_custom_call.1} parent=0
    #allocation2 [shape = 'u8[4096]{0}', space=vmem, size = 0x1000, scoped, tag = 'input window, operand 0, single buffered']
    #allocation3 [shape = 's32[1]{0}', space=sflag, size = 0x4, scoped, tag = 'scoped memory for tpu_custom_call.1']
    #allocation4 [shape = 's32[1]{0}', space=sflag, size = 0x4, scoped, tag = 'scoped memory for tpu_custom_call.1']
    #allocation5 [shape = 'u8[81920]{0}', space=vmem, size = 0x14000, scoped, tag = 'input window, operand 1, single buffered']
    #allocation6 [shape = 's32[1]{0}', space=sflag, size = 0x4, scoped, tag = 'scoped memory for tpu_custom_call.1']
    #allocation7 [shape = 'u8[16384]{0}', space=vmem, size = 0x4000, scoped, tag = 'output window, operand 0, single buffered']
    %7 = vsyncpa [#allocation3], 0
    %8 = vsyncpa [#allocation6], 0
    %9 = vsyncpa [#allocation4], 0
    // Predicated region
    $region2: #{tpu_custom_call.1} parent=1 // pred_check
      _
    $region3: #{tpu_custom_call.1} parent=1 // pred_check_branch
      %11 = sbr.rel (0) target = $region5
    $region4: #{tpu_custom_call.1} parent=1 // pred_region
      %13 = vsyncadd [#allocation3], 0
      %s15 = sshll.u32 %s0, 4
      %s16 = int_to_ptr.hbm [resolvable:$true] %s15
      %s17 = sshll.u32 [#allocation2], 4
      %s18 = int_to_ptr.vmem [resolvable:$true] %s17
      %20 = dma.hbm_to_vmem [thread:$0]  %s16, 128, %s18, [#allocation3]
    $region5: #{tpu_custom_call.1} parent=1 // pred_fallthru
      _
    // Predicated region
    $region6: #{tpu_custom_call.1} parent=1 // pred_check
      _
    $region7: #{tpu_custom_call.1} parent=1 // pred_check_branch
      %22 = sbr.rel (0) target = $region9
    $region8: #{tpu_custom_call.1} parent=1 // pred_region
      %24 = vsyncadd [#allocation6], 0
      %s25 = sshll.u32 %s1, 4
      %s26 = int_to_ptr.hbm [resolvable:$true] %s25
      %s27 = sshll.u32 [#allocation5], 4
      %s28 = int_to_ptr.vmem [resolvable:$true] %s27
      %33 = dma.hbm_to_vmem [thread:$0]  %s26, 2560, %s28, [#allocation6], 512, 512, 32
    $region9: #{tpu_custom_call.1} parent=1 // pred_fallthru
      _
    // Predicated region
    $region10: #{tpu_custom_call.1} parent=1 // pred_check
      _
    $region11: #{tpu_custom_call.1} parent=1 // pred_check_branch
      %35 = sbr.rel (0) target = $region13
    $region12: #{tpu_custom_call.1} parent=1 // pred_region
      %37 = dma.done [#allocation3], 128
    $region13: #{tpu_custom_call.1} parent=1 // pred_fallthru
      _
    // Predicated region
    $region14: #{tpu_custom_call.1} parent=1 // pred_check
      _
    $region15: #{tpu_custom_call.1} parent=1 // pred_check_branch
      %39 = sbr.rel (0) target = $region17
    $region16: #{tpu_custom_call.1} parent=1 // pred_region
      %41 = dma.done [#allocation6], 2560
    $region17: #{tpu_custom_call.1} parent=1 // pred_fallthru
      _
    %v42 = vld [vmem:[#allocation2] sm:$0xff]
    %v43 = vld [vmem:[#allocation5] sm:$0xff]
    %v44 = vld [vmem:[#allocation5 + $0x8] sm:$0xff]
    %v45 = vld [vmem:[#allocation5 + $0x10] sm:$0xff]
    %v46 = vld [vmem:[#allocation5 + $0x18] sm:$0xff]
    %v47 = vld [vmem:[#allocation5 + $0x20] sm:$0xff]
    %v48 = vld [vmem:[#allocation5 + $0x28] sm:$0xff]
    %v49 = vld [vmem:[#allocation5 + $0x30] sm:$0xff]
    %v50 = vld [vmem:[#allocation5 + $0x38] sm:$0xff]
    %v51 = vld [vmem:[#allocation5 + $0x40] sm:$0xff]
    %v52 = vld [vmem:[#allocation5 + $0x48] sm:$0xff]
    %v53 = vld [vmem:[#allocation5 + $0x50] sm:$0xff]
    %v54 = vld [vmem:[#allocation5 + $0x58] sm:$0xff]
    %v55 = vld [vmem:[#allocation5 + $0x60] sm:$0xff]
    %v56 = vld [vmem:[#allocation5 + $0x68] sm:$0xff]
    %v57 = vld [vmem:[#allocation5 + $0x70] sm:$0xff]
    %v58 = vld [vmem:[#allocation5 + $0x78] sm:$0xff]
    %v59 = vld [vmem:[#allocation5 + $0x80] sm:$0x1f]
    %v60 = vld [vmem:[#allocation5 + $0x88] sm:$0x1f]
    %v61 = vld [vmem:[#allocation5 + $0x90] sm:$0x1f]
    %v62 = vld [vmem:[#allocation5 + $0x98] sm:$0x1f]
    %vm63 = vcmask 302080
    %v65 = vsel %vm63, %v42, 0
    %vm67 = vcmask 1044480
    %v69 = vsel %vm67, %v59, 0
    %v72 = vsel %vm67, %v60, 0
    %v75 = vsel %vm67, %v61, 0
    %v78 = vsel %vm67, %v62, 0
    %80 = vmatpush.msra.mxu0 0.0
    %81 = vmatpush.msra.mxu0 0.0
    %82 = vmatpush.msra.mxu0 0.0
    %83 = vmatpush.msra.mxu0 0.0
    %84 = vmatpush.msra.mxu0 0.0
    %85 = vmatpush.msra.mxu0 0.0
    %86 = vmatpush.msra.mxu0 0.0
    %87 = vmatpush.msra.mxu0 0.0
    %88 = vmatpush.msra.mxu0 0.0
    %89 = vmatpush.msra.mxu0 0.0
    %90 = vmatpush.msra.mxu0 0.0
    %91 = vmatpush.msra.mxu0 %v69
    %92 = vmatpush.msra.mxu0 %v55
    %93 = vmatpush.msra.mxu0 %v51
    %94 = vmatpush.msra.mxu0 %v47
    %95 = vmatpush.msra.mxu0 %v43
    %96 = vmatmul.f32.gmra.mxu0 %v65
    %v97 = vpop.f32.mrf.mxu0
    %v98 = vadd.f32 0.0, %v97
    %99 = vdwg.mxu0
    %100 = vmatpush.msra.mxu0 0.0
    %101 = vmatpush.msra.mxu0 0.0
    %102 = vmatpush.msra.mxu0 0.0
    %103 = vmatpush.msra.mxu0 0.0
    %104 = vmatpush.msra.mxu0 0.0
    %105 = vmatpush.msra.mxu0 0.0
    %106 = vmatpush.msra.mxu0 0.0
    %107 = vmatpush.msra.mxu0 0.0
    %108 = vmatpush.msra.mxu0 0.0
    %109 = vmatpush.msra.mxu0 0.0
    %110 = vmatpush.msra.mxu0 0.0
    %111 = vmatpush.msra.mxu0 %v72
    %112 = vmatpush.msra.mxu0 %v56
    %113 = vmatpush.msra.mxu0 %v52
    %114 = vmatpush.msra.mxu0 %v48
    %115 = vmatpush.msra.mxu0 %v44
    %116 = vmatmul.f32.gmra.mxu0 %v65
    %v117 = vpop.f32.mrf.mxu0
    %v118 = vadd.f32 0.0, %v117
    %119 = vdwg.mxu0
    %120 = vmatpush.msra.mxu0 0.0
    %121 = vmatpush.msra.mxu0 0.0
    %122 = vmatpush.msra.mxu0 0.0
    %123 = vmatpush.msra.mxu0 0.0
    %124 = vmatpush.msra.mxu0 0.0
    %125 = vmatpush.msra.mxu0 0.0
    %126 = vmatpush.msra.mxu0 0.0
    %127 = vmatpush.msra.mxu0 0.0
    %128 = vmatpush.msra.mxu0 0.0
    %129 = vmatpush.msra.mxu0 0.0
    %130 = vmatpush.msra.mxu0 0.0
    %131 = vmatpush.msra.mxu0 %v75
    %132 = vmatpush.msra.mxu0 %v57
    %133 = vmatpush.msra.mxu0 %v53
    %134 = vmatpush.msra.mxu0 %v49
    %135 = vmatpush.msra.mxu0 %v45
    %136 = vmatmul.f32.gmra.mxu0 %v65
    %v137 = vpop.f32.mrf.mxu0
    %v138 = vadd.f32 0.0, %v137
    %139 = vdwg.mxu0
    %140 = vmatpush.msra.mxu0 0.0
    %141 = vmatpush.msra.mxu0 0.0
    %142 = vmatpush.msra.mxu0 0.0
    %143 = vmatpush.msra.mxu0 0.0
    %144 = vmatpush.msra.mxu0 0.0
    %145 = vmatpush.msra.mxu0 0.0
    %146 = vmatpush.msra.mxu0 0.0
    %147 = vmatpush.msra.mxu0 0.0
    %148 = vmatpush.msra.mxu0 0.0
    %149 = vmatpush.msra.mxu0 0.0
    %150 = vmatpush.msra.mxu0 0.0
    %151 = vmatpush.msra.mxu0 %v78
    %152 = vmatpush.msra.mxu0 %v58
    %153 = vmatpush.msra.mxu0 %v54
    %154 = vmatpush.msra.mxu0 %v50
    %155 = vmatpush.msra.mxu0 %v46
    %156 = vmatmul.f32.gmra.mxu0 %v65
    %v157 = vpop.f32.mrf.mxu0
    %v158 = vadd.f32 0.0, %v157
    %159 = vdwg.mxu0
    %vm160 = vcmp.ge.f32.partialorder %v98, 0.0
    %vm161 = vcmp.ge.f32.partialorder %v118, 0.0
    %vm162 = vcmp.ge.f32.partialorder %v138, 0.0
    %vm163 = vcmp.ge.f32.partialorder %v158, 0.0
    %v164 = vmul.f32 %v98, 0.01
    %v165 = vmul.f32 %v118, 0.01
    %v166 = vmul.f32 %v138, 0.01
    %v167 = vmul.f32 %v158, 0.01
    %v168 = vsel %vm160, %v98, %v164
    %v169 = vsel %vm161, %v118, %v165
    %v170 = vsel %vm162, %v138, %v166
    %v171 = vsel %vm163, %v158, %v167
    %172 = vst [vmem:[#allocation7] sm:$0xff] %v168
    %173 = vst [vmem:[#allocation7 + $0x8] sm:$0xff] %v169
    %174 = vst [vmem:[#allocation7 + $0x10] sm:$0xff] %v170
    %175 = vst [vmem:[#allocation7 + $0x18] sm:$0xff] %v171
    // Predicated region
    $region18: #{tpu_custom_call.1} parent=1 // pred_check
      _
    $region19: #{tpu_custom_call.1} parent=1 // pred_check_branch
      %177 = sbr.rel (0) target = $region21
    $region20: #{tpu_custom_call.1} parent=1 // pred_region
      %179 = vsyncadd [#allocation4], 0
      %s181 = sshll.u32 [#allocation7], 4
      %s182 = int_to_ptr.vmem [resolvable:$true] %s181
      %s183 = sshll.u32 %s2, 4
      %s184 = int_to_ptr.hbm [resolvable:$true] %s183
      %186 = dma.vmem_to_hbm [thread:$0]  %s182, 512, %s184, [#allocation4]
    $region21: #{tpu_custom_call.1} parent=1 // pred_fallthru
      _
    // Predicated region
    $region22: #{tpu_custom_call.1} parent=1 // pred_check
      _
    $region23: #{tpu_custom_call.1} parent=1 // pred_check_branch
      %188 = sbr.rel (0) target = $region25
    $region24: #{tpu_custom_call.1} parent=1 // pred_region
      %190 = dma.done [#allocation4], 512
    $region25: #{tpu_custom_call.1} parent=1 // pred_fallthru
      _
    %191 = vsyncpa [#allocation3], 1
    %192 = vsyncpa [#allocation6], 1
    %193 = vsyncpa [#allocation4], 1

</llo_original>
